<compile_context>
chip_gen: v5e
topology: v5e:2x2
jax: 0.10.0
libtpu: 0.0.40
codegen_flags: <defaults>
</compile_context>

<pallas_src>
import functools

import jax
import jax.numpy as jnp
from jax.experimental import pallas as pl
from jax.experimental.pallas import tpu as pltpu


def simplenet_kernel(x_ref, wih_ref, whh_ref, b_ref,
                     w1_ref, b1_ref, w2_ref, b2_ref,
                     out_ref, xw_sc, h_acc,
                     *, seq_len, batch, hidden_size):
    T, B, H = seq_len, batch, hidden_size

    # ---- Hoisted input projection for ALL time steps (one MXU matmul) ----
    # (T*B, I) @ (I, 4H) + (1, 4H)  -> VMEM scratch, sliced per step.
    # NOTE: g-gate columns of wih/b arrive pre-scaled by 2 from the wrapper.
    xw_sc[...] = (jnp.dot(x_ref[...], wih_ref[...],
                          preferred_element_type=jnp.float32)
                  + b_ref[...])

    whh = whh_ref[...]                        # (H, 4H) bf16; loaded once, stays hot.

    # ---- Sequential LSTM recurrence: only h @ W_hh^T per step ------------
    def step(t, carry):
        h, c = carry
        row = pl.multiple_of(t * B, B)
        gates = xw_sc[pl.ds(row, B), :] + jnp.dot(
            h.astype(jnp.bfloat16), whh,
            preferred_element_type=jnp.float32)                   # (B, 4H)
        # ONE full-width EUP pass; gate order i, f, g, o.
        sig = jax.nn.sigmoid(gates)
        i_g = sig[:, 0:H]
        f_g = sig[:, H:2 * H]
        g_g = 2.0 * sig[:, 2 * H:3 * H] - 1.0   # tanh(x) = 2*sigmoid(2x) - 1
        o_g = sig[:, 3 * H:4 * H]
        c_t = f_g * c + i_g * g_g
        h_t = o_g * jnp.tanh(c_t)
        h_acc[pl.ds(row, B), :] = h_t
        return (h_t, c_t)

    init = (jnp.zeros((B, H), jnp.float32), jnp.zeros((B, H), jnp.float32))
    jax.lax.fori_loop(0, T, step, init, unroll=True)

    # ---- fc1 + ReLU, fc2 + ReLU batched over all T*B rows; one store -----
    hs = h_acc[...]                                               # (T*B, H)
    y1 = jnp.maximum(
        jnp.dot(hs, w1_ref[...], preferred_element_type=jnp.float32)
        + b1_ref[...], 0.0)
    y2 = jnp.maximum(
        jnp.dot(y1, w2_ref[...], preferred_element_type=jnp.float32)
        + b2_ref[...], 0.0)                                       # (T*B, 128) lane-dense
    out_ref[...] = y2.astype(out_ref.dtype)


def simplenet_forward(x, params):
    """x: (T, B, I) float32 -> (T, B, O) float32."""
    T, B, I = x.shape
    wih_t = params["wih_t"]     # (I, 4H)
    whh_t = params["whh_t"]     # (H, 4H)
    b = params["b"]             # (1, 4H)  == b_ih + b_hh
    w1_t = params["w1_t"]       # (H, H)
    b1 = params["b1"]           # (1, H)
    w2_t = params["w2_t"]       # (H, O)
    b2 = params["b2"]           # (1, O)
    H = whh_t.shape[0]
    O = w2_t.shape[1]

    # Pre-scale the g-gate (cols 2H:3H) by 2 so the kernel can compute
    # tanh via the single sigmoid pass: tanh(x) = 2*sigmoid(2x) - 1.
    g_scale = jnp.ones((1, 4 * H), jnp.float32).at[:, 2 * H:3 * H].set(2.0)
    wih_s = wih_t * g_scale
    whh_s = (whh_t * g_scale).astype(jnp.bfloat16)   # bf16 operand for MXU recurrence
    b_s = b * g_scale

    # Lane-dense output: pad fc2 to 128 output columns, slice back afterwards.
    O_PAD = 128
    w2_p = jnp.zeros((H, O_PAD), jnp.float32).at[:, :O].set(w2_t)
    b2_p = jnp.zeros((1, O_PAD), jnp.float32).at[:, :O].set(b2)

    kernel = functools.partial(simplenet_kernel,
                               seq_len=T, batch=B, hidden_size=H)

    vmem_spec = lambda: pl.BlockSpec(memory_space=pltpu.MemorySpace.VMEM)

    out2d = pl.pallas_call(
        kernel,
        out_shape=jax.ShapeDtypeStruct((T * B, O_PAD), jnp.float32),
        in_specs=[vmem_spec() for _ in range(8)],
        out_specs=vmem_spec(),
        scratch_shapes=[
            pltpu.VMEM((T * B, 4 * H), jnp.float32),   # x @ W_ih^T + b (all steps)
            pltpu.VMEM((T * B, H), jnp.float32),       # h_t for all steps
        ],
    )(x.reshape(T * B, I), wih_s, whh_s, b_s, w1_t, b1, w2_p, b2_p)
    return out2d[:, :O].reshape(T, B, O)


def simplenet_reference(x, params):
    """Pure-JAX f32 reference (PyTorch LSTM semantics, gate order i,f,g,o)."""
    H = params["whh_t"].shape[0]

    def step(carry, x_t):
        h, c = carry
        gates = x_t @ params["wih_t"] + h @ params["whh_t"] + params["b"][0]
        i = jax.nn.sigmoid(gates[:, 0:H])
        f = jax.nn.sigmoid(gates[:, H:2 * H])
        g = jnp.tanh(gates[:, 2 * H:3 * H])
        o = jax.nn.sigmoid(gates[:, 3 * H:4 * H])
        c = f * c + i * g
        h = o * jnp.tanh(c)
        return (h, c), h

    B = x.shape[1]
    h0 = jnp.zeros((B, H), jnp.float32)
    c0 = jnp.zeros((B, H), jnp.float32)
    _, hs = jax.lax.scan(step, (h0, c0), x)
    y1 = jnp.maximum(hs @ params["w1_t"] + params["b1"][0], 0.0)
    y2 = jnp.maximum(y1 @ params["w2_t"] + params["b2"][0], 0.0)
    return y2


def init_params(key, input_size, hidden_size, output_size):
    ks = jax.random.split(key, 8)
    s = 1.0 / jnp.sqrt(hidden_size)
    u = lambda k, shape: jax.random.uniform(k, shape, jnp.float32, -s, s)
    # PyTorch stores weight_ih as (4H, I); we pass the transpose for x @ W^T.
    wih = u(ks[0], (4 * hidden_size, input_size))
    whh = u(ks[1], (4 * hidden_size, hidden_size))
    b_ih = u(ks[2], (4 * hidden_size,))
    b_hh = u(ks[3], (4 * hidden_size,))
    w1 = u(ks[4], (hidden_size, hidden_size))
    b1 = u(ks[5], (hidden_size,))
    w2 = u(ks[6], (output_size, hidden_size))
    b2 = u(ks[7], (output_size,))
    return {
        "wih_t": wih.T,                       # (I, 4H)
        "whh_t": whh.T,                       # (H, 4H)
        "b": (b_ih + b_hh)[None, :],          # (1, 4H)
        "w1_t": w1.T,                         # (H, H)
        "b1": b1[None, :],                    # (1, H)
        "w2_t": w2.T,                         # (H, O)
        "b2": b2[None, :],                    # (1, O)
    }


if __name__ == "__main__":
    seq_len, batch, input_size, hidden_size, output_size = 8, 8, 16, 32, 8

    key = jax.random.PRNGKey(0)
    k_x, k_p = jax.random.split(key)
    x = jax.random.normal(k_x, (seq_len, batch, input_size), jnp.float32)
    params = init_params(k_p, input_size, hidden_size, output_size)

    out = simplenet_forward(x, params)
    out = jax.block_until_ready(out)

    ref = simplenet_reference(x, params)
    assert out.shape == (seq_len, batch, output_size)
    # bf16 recurrent matmul (f32 accumulate) -> loosened tolerance vs f32 ref.
    assert jnp.allclose(out, ref, atol=3e-2, rtol=3e-2)

    print("KERNEL_OK")
</pallas_src>

<mosaic_0001>
module attributes {stable_mosaic.version = 11 : i64} {
  func.func @simplenet_kernel(%arg0: memref<64x16xf32, #tpu.memory_space<vmem>>, %arg1: memref<16x128xf32, #tpu.memory_space<vmem>>, %arg2: memref<32x128xbf16, #tpu.memory_space<vmem>>, %arg3: memref<1x128xf32, #tpu.memory_space<vmem>>, %arg4: memref<32x32xf32, #tpu.memory_space<vmem>>, %arg5: memref<1x32xf32, #tpu.memory_space<vmem>>, %arg6: memref<32x128xf32, #tpu.memory_space<vmem>>, %arg7: memref<1x128xf32, #tpu.memory_space<vmem>>, %arg8: memref<64x128xf32, #tpu.memory_space<vmem>>, %arg9: memref<64x128xf32, #tpu.memory_space<vmem>>, %arg10: memref<64x32xf32, #tpu.memory_space<vmem>>) attributes {dimension_semantics = [], scalar_prefetch = 0 : i64, scratch_operands = 2 : i64, tpu.core_type = #tpu.core_type<tc>} {
    %c0 = arith.constant 0 : index
    %c0_0 = arith.constant 0 : index
    %0 = vector.load %arg0[%c0, %c0_0] : memref<64x16xf32, #tpu.memory_space<vmem>>, vector<64x16xf32>
    %c0_1 = arith.constant 0 : index
    %c0_2 = arith.constant 0 : index
    %1 = vector.load %arg1[%c0_1, %c0_2] : memref<16x128xf32, #tpu.memory_space<vmem>>, vector<16x128xf32>
    %cst = arith.constant dense<0.000000e+00> : vector<64x128xf32>
    %2 = tpu.matmul %0, %1, %cst {dimension_numbers = #tpu.dot_dimension_numbers<[1], [0], [0], [1], [0, 0, 1, 1], [], []>} : vector<64x16xf32>, vector<16x128xf32>, vector<64x128xf32> -> vector<64x128xf32>
    %c0_3 = arith.constant 0 : index
    %c0_4 = arith.constant 0 : index
    %3 = vector.load %arg3[%c0_3, %c0_4] : memref<1x128xf32, #tpu.memory_space<vmem>>, vector<1x128xf32>
    %4 = vector.broadcast %3 : vector<1x128xf32> to vector<64x128xf32>
    %5 = arith.addf %2, %4 : vector<64x128xf32>
    %c0_5 = arith.constant 0 : index
    %c0_6 = arith.constant 0 : index
    %6 = vector.load %arg9[%c0_5, %c0_6] : memref<64x128xf32, #tpu.memory_space<vmem>>, vector<64x128xf32>
    tpu.vector_store %arg9[%c0_5, %c0_6], %5 {strides = array<i32>} : memref<64x128xf32, #tpu.memory_space<vmem>>, vector<64x128xf32>,
    %c0_7 = arith.constant 0 : index
    %c0_8 = arith.constant 0 : index
    %7 = vector.load %arg2[%c0_7, %c0_8] : memref<32x128xbf16, #tpu.memory_space<vmem>>, vector<32x128xbf16>
    %cst_9 = arith.constant 0.000000e+00 : f32
    %8 = vector.broadcast %cst_9 : f32 to vector<8x32xf32>
    %cst_10 = arith.constant 0.000000e+00 : f32
    %9 = vector.broadcast %cst_10 : f32 to vector<8x32xf32>
    %c0_i32 = arith.constant 0 : i32
    %c8_i32 = arith.constant 8 : i32
    %10 = arith.muli %c0_i32, %c8_i32 : i32
    %11 = tpu.assume_multiple %10, 8 : i32
    %12 = arith.index_cast %11 : i32 to index
    %c0_11 = arith.constant 0 : index
    %13 = vector.load %arg9[%12, %c0_11] : memref<64x128xf32, #tpu.memory_space<vmem>>, vector<8x128xf32>
    %14 = arith.truncf %8 : vector<8x32xf32> to vector<8x32xbf16>
    %cst_12 = arith.constant dense<0.000000e+00> : vector<8x128xf32>
    %15 = tpu.matmul %14, %7, %cst_12 {dimension_numbers = #tpu.dot_dimension_numbers<[1], [0], [0], [1], [0, 0, 1, 1], [], []>} : vector<8x32xbf16>, vector<32x128xbf16>, vector<8x128xf32> -> vector<8x128xf32>
    %16 = arith.addf %13, %15 : vector<8x128xf32>
    %17 = arith.negf %16 : vector<8x128xf32>
    %18 = math.exp %17 : vector<8x128xf32>
    %cst_13 = arith.constant 1.000000e+00 : f32
    %19 = vector.broadcast %cst_13 : f32 to vector<8x128xf32>
    %20 = arith.addf %19, %18 : vector<8x128xf32>
    %21 = arith.divf %19, %20 : vector<8x128xf32>
    %22 = vector.extract_strided_slice %21 {offsets = [0, 0], sizes = [8, 32], strides = [1, 1]} : vector<8x128xf32> to vector<8x32xf32>
    %23 = vector.extract_strided_slice %21 {offsets = [0, 32], sizes = [8, 32], strides = [1, 1]} : vector<8x128xf32> to vector<8x32xf32>
    %24 = vector.extract_strided_slice %21 {offsets = [0, 64], sizes = [8, 32], strides = [1, 1]} : vector<8x128xf32> to vector<8x32xf32>
    %cst_14 = arith.constant 2.000000e+00 : f32
    %25 = vector.broadcast %cst_14 : f32 to vector<8x32xf32>
    %26 = arith.mulf %25, %24 : vector<8x32xf32>
    %cst_15 = arith.constant 1.000000e+00 : f32
    %27 = vector.broadcast %cst_15 : f32 to vector<8x32xf32>
    %28 = arith.subf %26, %27 : vector<8x32xf32>
    %29 = vector.extract_strided_slice %21 {offsets = [0, 96], sizes = [8, 32], strides = [1, 1]} : vector<8x128xf32> to vector<8x32xf32>
    %30 = arith.mulf %23, %9 : vector<8x32xf32>
    %31 = arith.mulf %22, %28 : vector<8x32xf32>
    %32 = arith.addf %30, %31 : vector<8x32xf32>
    %33 = math.tanh %32 : vector<8x32xf32>
    %34 = arith.mulf %29, %33 : vector<8x32xf32>
    %35 = arith.index_cast %11 : i32 to index
    %c0_16 = arith.constant 0 : index
    %36 = vector.load %arg10[%35, %c0_16] : memref<64x32xf32, #tpu.memory_space<vmem>>, vector<8x32xf32>
    tpu.vector_store %arg10[%35, %c0_16], %34 {strides = array<i32>} : memref<64x32xf32, #tpu.memory_space<vmem>>, vector<8x32xf32>,
    %c1_i32 = arith.constant 1 : i32
    %c8_i32_17 = arith.constant 8 : i32
    %37 = arith.muli %c1_i32, %c8_i32_17 : i32
    %38 = tpu.assume_multiple %37, 8 : i32
    %39 = arith.index_cast %38 : i32 to index
    %c0_18 = arith.constant 0 : index
    %40 = vector.load %arg9[%39, %c0_18] : memref<64x128xf32, #tpu.memory_space<vmem>>, vector<8x128xf32>
    %41 = arith.truncf %34 : vector<8x32xf32> to vector<8x32xbf16>
    %cst_19 = arith.constant dense<0.000000e+00> : vector<8x128xf32>
    %42 = tpu.matmul %41, %7, %cst_19 {dimension_numbers = #tpu.dot_dimension_numbers<[1], [0], [0], [1], [0, 0, 1, 1], [], []>} : vector<8x32xbf16>, vector<32x128xbf16>, vector<8x128xf32> -> vector<8x128xf32>
    %43 = arith.addf %40, %42 : vector<8x128xf32>
    %44 = arith.negf %43 : vector<8x128xf32>
    %45 = math.exp %44 : vector<8x128xf32>
    %cst_20 = arith.constant 1.000000e+00 : f32
    %46 = vector.broadcast %cst_20 : f32 to vector<8x128xf32>
    %47 = arith.addf %46, %45 : vector<8x128xf32>
    %48 = arith.divf %46, %47 : vector<8x128xf32>
    %49 = vector.extract_strided_slice %48 {offsets = [0, 0], sizes = [8, 32], strides = [1, 1]} : vector<8x128xf32> to vector<8x32xf32>
    %50 = vector.extract_strided_slice %48 {offsets = [0, 32], sizes = [8, 32], strides = [1, 1]} : vector<8x128xf32> to vector<8x32xf32>
    %51 = vector.extract_strided_slice %48 {offsets = [0, 64], sizes = [8, 32], strides = [1, 1]} : vector<8x128xf32> to vector<8x32xf32>
    %cst_21 = arith.constant 2.000000e+00 : f32
    %52 = vector.broadcast %cst_21 : f32 to vector<8x32xf32>
    %53 = arith.mulf %52, %51 : vector<8x32xf32>
    %cst_22 = arith.constant 1.000000e+00 : f32
    %54 = vector.broadcast %cst_22 : f32 to vector<8x32xf32>
    %55 = arith.subf %53, %54 : vector<8x32xf32>
    %56 = vector.extract_strided_slice %48 {offsets = [0, 96], sizes = [8, 32], strides = [1, 1]} : vector<8x128xf32> to vector<8x32xf32>
    %57 = arith.mulf %50, %32 : vector<8x32xf32>
    %58 = arith.mulf %49, %55 : vector<8x32xf32>
    %59 = arith.addf %57, %58 : vector<8x32xf32>
    %60 = math.tanh %59 : vector<8x32xf32>
    %61 = arith.mulf %56, %60 : vector<8x32xf32>
    %62 = arith.index_cast %38 : i32 to index
    %c0_23 = arith.constant 0 : index
    %63 = vector.load %arg10[%62, %c0_23] : memref<64x32xf32, #tpu.memory_space<vmem>>, vector<8x32xf32>
    tpu.vector_store %arg10[%62, %c0_23], %61 {strides = array<i32>} : memref<64x32xf32, #tpu.memory_space<vmem>>, vector<8x32xf32>,
    %c2_i32 = arith.constant 2 : i32
    %c8_i32_24 = arith.constant 8 : i32
    %64 = arith.muli %c2_i32, %c8_i32_24 : i32
    %65 = tpu.assume_multiple %64, 8 : i32
    %66 = arith.index_cast %65 : i32 to index
    %c0_25 = arith.constant 0 : index
    %67 = vector.load %arg9[%66, %c0_25] : memref<64x128xf32, #tpu.memory_space<vmem>>, vector<8x128xf32>
    %68 = arith.truncf %61 : vector<8x32xf32> to vector<8x32xbf16>
    %cst_26 = arith.constant dense<0.000000e+00> : vector<8x128xf32>
    %69 = tpu.matmul %68, %7, %cst_26 {dimension_numbers = #tpu.dot_dimension_numbers<[1], [0], [0], [1], [0, 0, 1, 1], [], []>} : vector<8x32xbf16>, vector<32x128xbf16>, vector<8x128xf32> -> vector<8x128xf32>
    %70 = arith.addf %67, %69 : vector<8x128xf32>
    %71 = arith.negf %70 : vector<8x128xf32>
    %72 = math.exp %71 : vector<8x128xf32>
    %cst_27 = arith.constant 1.000000e+00 : f32
    %73 = vector.broadcast %cst_27 : f32 to vector<8x128xf32>
    %74 = arith.addf %73, %72 : vector<8x128xf32>
    %75 = arith.divf %73, %74 : vector<8x128xf32>
    %76 = vector.extract_strided_slice %75 {offsets = [0, 0], sizes = [8, 32], strides = [1, 1]} : vector<8x128xf32> to vector<8x32xf32>
    %77 = vector.extract_strided_slice %75 {offsets = [0, 32], sizes = [8, 32], strides = [1, 1]} : vector<8x128xf32> to vector<8x32xf32>
    %78 = vector.extract_strided_slice %75 {offsets = [0, 64], sizes = [8, 32], strides = [1, 1]} : vector<8x128xf32> to vector<8x32xf32>
    %cst_28 = arith.constant 2.000000e+00 : f32
    %79 = vector.broadcast %cst_28 : f32 to vector<8x32xf32>
    %80 = arith.mulf %79, %78 : vector<8x32xf32>
    %cst_29 = arith.constant 1.000000e+00 : f32
    %81 = vector.broadcast %cst_29 : f32 to vector<8x32xf32>
    %82 = arith.subf %80, %81 : vector<8x32xf32>
    %83 = vector.extract_strided_slice %75 {offsets = [0, 96], sizes = [8, 32], strides = [1, 1]} : vector<8x128xf32> to vector<8x32xf32>
    %84 = arith.mulf %77, %59 : vector<8x32xf32>
    %85 = arith.mulf %76, %82 : vector<8x32xf32>
    %86 = arith.addf %84, %85 : vector<8x32xf32>
    %87 = math.tanh %86 : vector<8x32xf32>
    %88 = arith.mulf %83, %87 : vector<8x32xf32>
    %89 = arith.index_cast %65 : i32 to index
    %c0_30 = arith.constant 0 : index
    %90 = vector.load %arg10[%89, %c0_30] : memref<64x32xf32, #tpu.memory_space<vmem>>, vector<8x32xf32>
    tpu.vector_store %arg10[%89, %c0_30], %88 {strides = array<i32>} : memref<64x32xf32, #tpu.memory_space<vmem>>, vector<8x32xf32>,
    %c3_i32 = arith.constant 3 : i32
    %c8_i32_31 = arith.constant 8 : i32
    %91 = arith.muli %c3_i32, %c8_i32_31 : i32
    %92 = tpu.assume_multiple %91, 8 : i32
    %93 = arith.index_cast %92 : i32 to index
    %c0_32 = arith.constant 0 : index
    %94 = vector.load %arg9[%93, %c0_32] : memref<64x128xf32, #tpu.memory_space<vmem>>, vector<8x128xf32>
    %95 = arith.truncf %88 : vector<8x32xf32> to vector<8x32xbf16>
    %cst_33 = arith.constant dense<0.000000e+00> : vector<8x128xf32>
    %96 = tpu.matmul %95, %7, %cst_33 {dimension_numbers = #tpu.dot_dimension_numbers<[1], [0], [0], [1], [0, 0, 1, 1], [], []>} : vector<8x32xbf16>, vector<32x128xbf16>, vector<8x128xf32> -> vector<8x128xf32>
    %97 = arith.addf %94, %96 : vector<8x128xf32>
    %98 = arith.negf %97 : vector<8x128xf32>
    %99 = math.exp %98 : vector<8x128xf32>
    %cst_34 = arith.constant 1.000000e+00 : f32
    %100 = vector.broadcast %cst_34 : f32 to vector<8x128xf32>
    %101 = arith.addf %100, %99 : vector<8x128xf32>
    %102 = arith.divf %100, %101 : vector<8x128xf32>
    %103 = vector.extract_strided_slice %102 {offsets = [0, 0], sizes = [8, 32], strides = [1, 1]} : vector<8x128xf32> to vector<8x32xf32>
    %104 = vector.extract_strided_slice %102 {offsets = [0, 32], sizes = [8, 32], strides = [1, 1]} : vector<8x128xf32> to vector<8x32xf32>
    %105 = vector.extract_strided_slice %102 {offsets = [0, 64], sizes = [8, 32], strides = [1, 1]} : vector<8x128xf32> to vector<8x32xf32>
    %cst_35 = arith.constant 2.000000e+00 : f32
    %106 = vector.broadcast %cst_35 : f32 to vector<8x32xf32>
    %107 = arith.mulf %106, %105 : vector<8x32xf32>
    %cst_36 = arith.constant 1.000000e+00 : f32
    %108 = vector.broadcast %cst_36 : f32 to vector<8x32xf32>
    %109 = arith.subf %107, %108 : vector<8x32xf32>
    %110 = vector.extract_strided_slice %102 {offsets = [0, 96], sizes = [8, 32], strides = [1, 1]} : vector<8x128xf32> to vector<8x32xf32>
    %111 = arith.mulf %104, %86 : vector<8x32xf32>
    %112 = arith.mulf %103, %109 : vector<8x32xf32>
    %113 = arith.addf %111, %112 : vector<8x32xf32>
    %114 = math.tanh %113 : vector<8x32xf32>
    %115 = arith.mulf %110, %114 : vector<8x32xf32>
    %116 = arith.index_cast %92 : i32 to index
    %c0_37 = arith.constant 0 : index
    %117 = vector.load %arg10[%116, %c0_37] : memref<64x32xf32, #tpu.memory_space<vmem>>, vector<8x32xf32>
    tpu.vector_store %arg10[%116, %c0_37], %115 {strides = array<i32>} : memref<64x32xf32, #tpu.memory_space<vmem>>, vector<8x32xf32>,
    %c4_i32 = arith.constant 4 : i32
    %c8_i32_38 = arith.constant 8 : i32
    %118 = arith.muli %c4_i32, %c8_i32_38 : i32
    %119 = tpu.assume_multiple %118, 8 : i32
    %120 = arith.index_cast %119 : i32 to index
    %c0_39 = arith.constant 0 : index
    %121 = vector.load %arg9[%120, %c0_39] : memref<64x128xf32, #tpu.memory_space<vmem>>, vector<8x128xf32>
    %122 = arith.truncf %115 : vector<8x32xf32> to vector<8x32xbf16>
    %cst_40 = arith.constant dense<0.000000e+00> : vector<8x128xf32>
    %123 = tpu.matmul %122, %7, %cst_40 {dimension_numbers = #tpu.dot_dimension_numbers<[1], [0], [0], [1], [0, 0, 1, 1], [], []>} : vector<8x32xbf16>, vector<32x128xbf16>, vector<8x128xf32> -> vector<8x128xf32>
    %124 = arith.addf %121, %123 : vector<8x128xf32>
    %125 = arith.negf %124 : vector<8x128xf32>
    %126 = math.exp %125 : vector<8x128xf32>
    %cst_41 = arith.constant 1.000000e+00 : f32
    %127 = vector.broadcast %cst_41 : f32 to vector<8x128xf32>
    %128 = arith.addf %127, %126 : vector<8x128xf32>
    %129 = arith.divf %127, %128 : vector<8x128xf32>
    %130 = vector.extract_strided_slice %129 {offsets = [0, 0], sizes = [8, 32], strides = [1, 1]} : vector<8x128xf32> to vector<8x32xf32>
    %131 = vector.extract_strided_slice %129 {offsets = [0, 32], sizes = [8, 32], strides = [1, 1]} : vector<8x128xf32> to vector<8x32xf32>
    %132 = vector.extract_strided_slice %129 {offsets = [0, 64], sizes = [8, 32], strides = [1, 1]} : vector<8x128xf32> to vector<8x32xf32>
    %cst_42 = arith.constant 2.000000e+00 : f32
    %133 = vector.broadcast %cst_42 : f32 to vector<8x32xf32>
    %134 = arith.mulf %133, %132 : vector<8x32xf32>
    %cst_43 = arith.constant 1.000000e+00 : f32
    %135 = vector.broadcast %cst_43 : f32 to vector<8x32xf32>
    %136 = arith.subf %134, %135 : vector<8x32xf32>
    %137 = vector.extract_strided_slice %129 {offsets = [0, 96], sizes = [8, 32], strides = [1, 1]} : vector<8x128xf32> to vector<8x32xf32>
    %138 = arith.mulf %131, %113 : vector<8x32xf32>
    %139 = arith.mulf %130, %136 : vector<8x32xf32>
    %140 = arith.addf %138, %139 : vector<8x32xf32>
    %141 = math.tanh %140 : vector<8x32xf32>
    %142 = arith.mulf %137, %141 : vector<8x32xf32>
    %143 = arith.index_cast %119 : i32 to index
    %c0_44 = arith.constant 0 : index
    %144 = vector.load %arg10[%143, %c0_44] : memref<64x32xf32, #tpu.memory_space<vmem>>, vector<8x32xf32>
    tpu.vector_store %arg10[%143, %c0_44], %142 {strides = array<i32>} : memref<64x32xf32, #tpu.memory_space<vmem>>, vector<8x32xf32>,
    %c5_i32 = arith.constant 5 : i32
    %c8_i32_45 = arith.constant 8 : i32
    %145 = arith.muli %c5_i32, %c8_i32_45 : i32
    %146 = tpu.assume_multiple %145, 8 : i32
    %147 = arith.index_cast %146 : i32 to index
    %c0_46 = arith.constant 0 : index
    %148 = vector.load %arg9[%147, %c0_46] : memref<64x128xf32, #tpu.memory_space<vmem>>, vector<8x128xf32>
    %149 = arith.truncf %142 : vector<8x32xf32> to vector<8x32xbf16>
    %cst_47 = arith.constant dense<0.000000e+00> : vector<8x128xf32>
    %150 = tpu.matmul %149, %7, %cst_47 {dimension_numbers = #tpu.dot_dimension_numbers<[1], [0], [0], [1], [0, 0, 1, 1], [], []>} : vector<8x32xbf16>, vector<32x128xbf16>, vector<8x128xf32> -> vector<8x128xf32>
    %151 = arith.addf %148, %150 : vector<8x128xf32>
    %152 = arith.negf %151 : vector<8x128xf32>
    %153 = math.exp %152 : vector<8x128xf32>
    %cst_48 = arith.constant 1.000000e+00 : f32
    %154 = vector.broadcast %cst_48 : f32 to vector<8x128xf32>
    %155 = arith.addf %154, %153 : vector<8x128xf32>
    %156 = arith.divf %154, %155 : vector<8x128xf32>
    %157 = vector.extract_strided_slice %156 {offsets = [0, 0], sizes = [8, 32], strides = [1, 1]} : vector<8x128xf32> to vector<8x32xf32>
    %158 = vector.extract_strided_slice %156 {offsets = [0, 32], sizes = [8, 32], strides = [1, 1]} : vector<8x128xf32> to vector<8x32xf32>
    %159 = vector.extract_strided_slice %156 {offsets = [0, 64], sizes = [8, 32], strides = [1, 1]} : vector<8x128xf32> to vector<8x32xf32>
    %cst_49 = arith.constant 2.000000e+00 : f32
    %160 = vector.broadcast %cst_49 : f32 to vector<8x32xf32>
    %161 = arith.mulf %160, %159 : vector<8x32xf32>
    %cst_50 = arith.constant 1.000000e+00 : f32
    %162 = vector.broadcast %cst_50 : f32 to vector<8x32xf32>
    %163 = arith.subf %161, %162 : vector<8x32xf32>
    %164 = vector.extract_strided_slice %156 {offsets = [0, 96], sizes = [8, 32], strides = [1, 1]} : vector<8x128xf32> to vector<8x32xf32>
    %165 = arith.mulf %158, %140 : vector<8x32xf32>
    %166 = arith.mulf %157, %163 : vector<8x32xf32>
    %167 = arith.addf %165, %166 : vector<8x32xf32>
    %168 = math.tanh %167 : vector<8x32xf32>
    %169 = arith.mulf %164, %168 : vector<8x32xf32>
    %170 = arith.index_cast %146 : i32 to index
    %c0_51 = arith.constant 0 : index
    %171 = vector.load %arg10[%170, %c0_51] : memref<64x32xf32, #tpu.memory_space<vmem>>, vector<8x32xf32>
    tpu.vector_store %arg10[%170, %c0_51], %169 {strides = array<i32>} : memref<64x32xf32, #tpu.memory_space<vmem>>, vector<8x32xf32>,
    %c6_i32 = arith.constant 6 : i32
    %c8_i32_52 = arith.constant 8 : i32
    %172 = arith.muli %c6_i32, %c8_i32_52 : i32
    %173 = tpu.assume_multiple %172, 8 : i32
    %174 = arith.index_cast %173 : i32 to index
    %c0_53 = arith.constant 0 : index
    %175 = vector.load %arg9[%174, %c0_53] : memref<64x128xf32, #tpu.memory_space<vmem>>, vector<8x128xf32>
    %176 = arith.truncf %169 : vector<8x32xf32> to vector<8x32xbf16>
    %cst_54 = arith.constant dense<0.000000e+00> : vector<8x128xf32>
    %177 = tpu.matmul %176, %7, %cst_54 {dimension_numbers = #tpu.dot_dimension_numbers<[1], [0], [0], [1], [0, 0, 1, 1], [], []>} : vector<8x32xbf16>, vector<32x128xbf16>, vector<8x128xf32> -> vector<8x128xf32>
    %178 = arith.addf %175, %177 : vector<8x128xf32>
    %179 = arith.negf %178 : vector<8x128xf32>
    %180 = math.exp %179 : vector<8x128xf32>
    %cst_55 = arith.constant 1.000000e+00 : f32
    %181 = vector.broadcast %cst_55 : f32 to vector<8x128xf32>
    %182 = arith.addf %181, %180 : vector<8x128xf32>
    %183 = arith.divf %181, %182 : vector<8x128xf32>
    %184 = vector.extract_strided_slice %183 {offsets = [0, 0], sizes = [8, 32], strides = [1, 1]} : vector<8x128xf32> to vector<8x32xf32>
    %185 = vector.extract_strided_slice %183 {offsets = [0, 32], sizes = [8, 32], strides = [1, 1]} : vector<8x128xf32> to vector<8x32xf32>
    %186 = vector.extract_strided_slice %183 {offsets = [0, 64], sizes = [8, 32], strides = [1, 1]} : vector<8x128xf32> to vector<8x32xf32>
    %cst_56 = arith.constant 2.000000e+00 : f32
    %187 = vector.broadcast %cst_56 : f32 to vector<8x32xf32>
    %188 = arith.mulf %187, %186 : vector<8x32xf32>
    %cst_57 = arith.constant 1.000000e+00 : f32
    %189 = vector.broadcast %cst_57 : f32 to vector<8x32xf32>
    %190 = arith.subf %188, %189 : vector<8x32xf32>
    %191 = vector.extract_strided_slice %183 {offsets = [0, 96], sizes = [8, 32], strides = [1, 1]} : vector<8x128xf32> to vector<8x32xf32>
    %192 = arith.mulf %185, %167 : vector<8x32xf32>
    %193 = arith.mulf %184, %190 : vector<8x32xf32>
    %194 = arith.addf %192, %193 : vector<8x32xf32>
    %195 = math.tanh %194 : vector<8x32xf32>
    %196 = arith.mulf %191, %195 : vector<8x32xf32>
    %197 = arith.index_cast %173 : i32 to index
    %c0_58 = arith.constant 0 : index
    %198 = vector.load %arg10[%197, %c0_58] : memref<64x32xf32, #tpu.memory_space<vmem>>, vector<8x32xf32>
    tpu.vector_store %arg10[%197, %c0_58], %196 {strides = array<i32>} : memref<64x32xf32, #tpu.memory_space<vmem>>, vector<8x32xf32>,
    %c7_i32 = arith.constant 7 : i32
    %c8_i32_59 = arith.constant 8 : i32
    %199 = arith.muli %c7_i32, %c8_i32_59 : i32
    %200 = tpu.assume_multiple %199, 8 : i32
    %201 = arith.index_cast %200 : i32 to index
    %c0_60 = arith.constant 0 : index
    %202 = vector.load %arg9[%201, %c0_60] : memref<64x128xf32, #tpu.memory_space<vmem>>, vector<8x128xf32>
    %203 = arith.truncf %196 : vector<8x32xf32> to vector<8x32xbf16>
    %cst_61 = arith.constant dense<0.000000e+00> : vector<8x128xf32>
    %204 = tpu.matmul %203, %7, %cst_61 {dimension_numbers = #tpu.dot_dimension_numbers<[1], [0], [0], [1], [0, 0, 1, 1], [], []>} : vector<8x32xbf16>, vector<32x128xbf16>, vector<8x128xf32> -> vector<8x128xf32>
    %205 = arith.addf %202, %204 : vector<8x128xf32>
    %206 = arith.negf %205 : vector<8x128xf32>
    %207 = math.exp %206 : vector<8x128xf32>
    %cst_62 = arith.constant 1.000000e+00 : f32
    %208 = vector.broadcast %cst_62 : f32 to vector<8x128xf32>
    %209 = arith.addf %208, %207 : vector<8x128xf32>
    %210 = arith.divf %208, %209 : vector<8x128xf32>
    %211 = vector.extract_strided_slice %210 {offsets = [0, 0], sizes = [8, 32], strides = [1, 1]} : vector<8x128xf32> to vector<8x32xf32>
    %212 = vector.extract_strided_slice %210 {offsets = [0, 32], sizes = [8, 32], strides = [1, 1]} : vector<8x128xf32> to vector<8x32xf32>
    %213 = vector.extract_strided_slice %210 {offsets = [0, 64], sizes = [8, 32], strides = [1, 1]} : vector<8x128xf32> to vector<8x32xf32>
    %cst_63 = arith.constant 2.000000e+00 : f32
    %214 = vector.broadcast %cst_63 : f32 to vector<8x32xf32>
    %215 = arith.mulf %214, %213 : vector<8x32xf32>
    %cst_64 = arith.constant 1.000000e+00 : f32
    %216 = vector.broadcast %cst_64 : f32 to vector<8x32xf32>
    %217 = arith.subf %215, %216 : vector<8x32xf32>
    %218 = vector.extract_strided_slice %210 {offsets = [0, 96], sizes = [8, 32], strides = [1, 1]} : vector<8x128xf32> to vector<8x32xf32>
    %219 = arith.mulf %212, %194 : vector<8x32xf32>
    %220 = arith.mulf %211, %217 : vector<8x32xf32>
    %221 = arith.addf %219, %220 : vector<8x32xf32>
    %222 = math.tanh %221 : vector<8x32xf32>
    %223 = arith.mulf %218, %222 : vector<8x32xf32>
    %224 = arith.index_cast %200 : i32 to index
    %c0_65 = arith.constant 0 : index
    %225 = vector.load %arg10[%224, %c0_65] : memref<64x32xf32, #tpu.memory_space<vmem>>, vector<8x32xf32>
    tpu.vector_store %arg10[%224, %c0_65], %223 {strides = array<i32>} : memref<64x32xf32, #tpu.memory_space<vmem>>, vector<8x32xf32>,
    %c8_i32_66 = arith.constant 8 : i32
    %c0_67 = arith.constant 0 : index
    %c0_68 = arith.constant 0 : index
    %226 = vector.load %arg10[%c0_67, %c0_68] : memref<64x32xf32, #tpu.memory_space<vmem>>, vector<64x32xf32>
    %c0_69 = arith.constant 0 : index
    %c0_70 = arith.constant 0 : index
    %227 = vector.load %arg4[%c0_69, %c0_70] : memref<32x32xf32, #tpu.memory_space<vmem>>, vector<32x32xf32>
    %cst_71 = arith.constant dense<0.000000e+00> : vector<64x32xf32>
    %228 = tpu.matmul %226, %227, %cst_71 {dimension_numbers = #tpu.dot_dimension_numbers<[1], [0], [0], [1], [0, 0, 1, 1], [], []>} : vector<64x32xf32>, vector<32x32xf32>, vector<64x32xf32> -> vector<64x32xf32>
    %c0_72 = arith.constant 0 : index
    %c0_73 = arith.constant 0 : index
    %229 = vector.load %arg5[%c0_72, %c0_73] : memref<1x32xf32, #tpu.memory_space<vmem>>, vector<1x32xf32>
    %230 = vector.broadcast %229 : vector<1x32xf32> to vector<64x32xf32>
    %231 = arith.addf %228, %230 : vector<64x32xf32>
    %cst_74 = arith.constant 0.000000e+00 : f32
    %232 = vector.broadcast %cst_74 : f32 to vector<64x32xf32>
    %233 = arith.maximumf %231, %232 : vector<64x32xf32>
    %c0_75 = arith.constant 0 : index
    %c0_76 = arith.constant 0 : index
    %234 = vector.load %arg6[%c0_75, %c0_76] : memref<32x128xf32, #tpu.memory_space<vmem>>, vector<32x128xf32>
    %cst_77 = arith.constant dense<0.000000e+00> : vector<64x128xf32>
    %235 = tpu.matmul %233, %234, %cst_77 {dimension_numbers = #tpu.dot_dimension_numbers<[1], [0], [0], [1], [0, 0, 1, 1], [], []>} : vector<64x32xf32>, vector<32x128xf32>, vector<64x128xf32> -> vector<64x128xf32>
    %c0_78 = arith.constant 0 : index
    %c0_79 = arith.constant 0 : index
    %236 = vector.load %arg7[%c0_78, %c0_79] : memref<1x128xf32, #tpu.memory_space<vmem>>, vector<1x128xf32>
    %237 = vector.broadcast %236 : vector<1x128xf32> to vector<64x128xf32>
    %238 = arith.addf %235, %237 : vector<64x128xf32>
    %cst_80 = arith.constant 0.000000e+00 : f32
    %239 = vector.broadcast %cst_80 : f32 to vector<64x128xf32>
    %240 = arith.maximumf %238, %239 : vector<64x128xf32>
    %c0_81 = arith.constant 0 : index
    %c0_82 = arith.constant 0 : index
    %241 = vector.load %arg8[%c0_81, %c0_82] : memref<64x128xf32, #tpu.memory_space<vmem>>, vector<64x128xf32>
    tpu.vector_store %arg8[%c0_81, %c0_82], %240 {strides = array<i32>} : memref<64x128xf32, #tpu.memory_space<vmem>>, vector<64x128xf32>,
    return
  }
}

</mosaic_0001>

<llo_original>
// kernel: tpu_custom_call.1
$region0: #{tpu_custom_call.1}
  #allocation0 [shape = 'u32[]', space=smem, size = 0x4, offset = 0x4, fixed_abs, tag = 'smem constant byte address 0x4 - core index']
  #allocation1 [shape = 'u32[72,128]{1,0:T(1,128)}', space=vmem, size = 0x9000, scoped, tag = 'internal scratch']
  #allocation2 [shape = 'f32[64,128]{1,0:T(8,128)}', space=vmem, size = 0x8000, scoped, tag = 'scratch operand']
  #allocation3 [shape = 'f32[64,32]{1,0:T(8,128)}', space=vmem, size = 0x8000, scoped, tag = 'scratch operand']
  %s0 = inlined_call_operand.vmem [shape: f32[64,16], index: 0, kind: input, shape index: {}]
  %s1 = inlined_call_operand.vmem [shape: f32[16,128], index: 1, kind: input, shape index: {}]
  %s2 = inlined_call_operand.hbm [shape: bf16[32,128], index: 2, kind: input, shape index: {}]
  %s3 = inlined_call_operand.vmem [shape: f32[1,128], index: 3, kind: input, shape index: {}]
  %s4 = inlined_call_operand.vmem [shape: f32[32,32], index: 4, kind: input, shape index: {}]
  %s5 = inlined_call_operand.vmem [shape: f32[1,32], index: 5, kind: input, shape index: {}]
  %s6 = inlined_call_operand.vmem [shape: f32[32,128], index: 6, kind: input, shape index: {}]
  %s7 = inlined_call_operand.vmem [shape: f32[1,128], index: 7, kind: input, shape index: {}]
  %s8 = inlined_call_operand.hbm [shape: f32[64,128], index: 8, kind: output, shape index: {}]
  %s9 = sld [smem:[#allocation0]]
  $region46: #{tpu_custom_call.1} parent=0
    _
  %s11 = ssub.s32 1, %s9
  %s12 = scalar_select 0, %s11, %s9
  $region1: #{tpu_custom_call.1} parent=0
    #allocation4 [shape = 'u8[8192]{0}', space=vmem, size = 0x2000, scoped, tag = 'input window, operand 2, single buffered']
    #allocation5 [shape = 's32[1]{0}', space=sflag, size = 0x4, scoped, tag = 'scoped memory for tpu_custom_call.1']
    #allocation6 [shape = 's32[1]{0}', space=sflag, size = 0x4, scoped, tag = 'scoped memory for tpu_custom_call.1']
    #allocation7 [shape = 'u8[32768]{0}', space=vmem, size = 0x8000, scoped, tag = 'output window, operand 0, single buffered']
    %13 = vsyncpa [#allocation5], 0
    %14 = vsyncpa [#allocation6], 0
    // Predicated region
    $region2: #{tpu_custom_call.1} parent=1 // pred_check
      _
    $region3: #{tpu_custom_call.1} parent=1 // pred_check_branch
      %16 = sbr.rel (0) target = $region5
    $region4: #{tpu_custom_call.1} parent=1 // pred_region
      _
    $region5: #{tpu_custom_call.1} parent=1 // pred_fallthru
      _
    // Predicated region
    $region6: #{tpu_custom_call.1} parent=1 // pred_check
      _
    $region7: #{tpu_custom_call.1} parent=1 // pred_check_branch
      %18 = sbr.rel (0) target = $region9
    $region8: #{tpu_custom_call.1} parent=1 // pred_region
      _
    $region9: #{tpu_custom_call.1} parent=1 // pred_fallthru
      _
    // Predicated region
    $region10: #{tpu_custom_call.1} parent=1 // pred_check
      _
    $region11: #{tpu_custom_call.1} parent=1 // pred_check_branch
      %20 = sbr.rel (0) target = $region13
    $region12: #{tpu_custom_call.1} parent=1 // pred_region
      %22 = vsyncadd [#allocation5], 0
      %s23 = sshll.u32 %s2, 4
      %s24 = int_to_ptr.hbm [resolvable:$true] %s23
      %s25 = sshll.u32 [#allocation4], 4
      %s26 = int_to_ptr.vmem [resolvable:$true] %s25
      %31 = dma.hbm_to_vmem [thread:$0]  %s24, 256, %s26, [#allocation5], 64, 64, 4
    $region13: #{tpu_custom_call.1} parent=1 // pred_fallthru
      _
    // Predicated region
    $region14: #{tpu_custom_call.1} parent=1 // pred_check
      _
    $region15: #{tpu_custom_call.1} parent=1 // pred_check_branch
      %33 = sbr.rel (0) target = $region17
    $region16: #{tpu_custom_call.1} parent=1 // pred_region
      _
    $region17: #{tpu_custom_call.1} parent=1 // pred_fallthru
      _
    // Predicated region
    $region18: #{tpu_custom_call.1} parent=1 // pred_check
      _
    $region19: #{tpu_custom_call.1} parent=1 // pred_check_branch
      %35 = sbr.rel (0) target = $region21
    $region20: #{tpu_custom_call.1} parent=1 // pred_region
      _
    $region21: #{tpu_custom_call.1} parent=1 // pred_fallthru
      _
    // Predicated region
    $region22: #{tpu_custom_call.1} parent=1 // pred_check
      _
    $region23: #{tpu_custom_call.1} parent=1 // pred_check_branch
      %37 = sbr.rel (0) target = $region25
    $region24: #{tpu_custom_call.1} parent=1 // pred_region
      _
    $region25: #{tpu_custom_call.1} parent=1 // pred_fallthru
      _
    // Predicated region
    $region26: #{tpu_custom_call.1} parent=1 // pred_check
      _
    $region27: #{tpu_custom_call.1} parent=1 // pred_check_branch
      %39 = sbr.rel (0) target = $region29
    $region28: #{tpu_custom_call.1} parent=1 // pred_region
      _
    $region29: #{tpu_custom_call.1} parent=1 // pred_fallthru
      _
    // Predicated region
    $region30: #{tpu_custom_call.1} parent=1 // pred_check
      _
    $region31: #{tpu_custom_call.1} parent=1 // pred_check_branch
      %41 = sbr.rel (0) target = $region33
    $region32: #{tpu_custom_call.1} parent=1 // pred_region
      _
    $region33: #{tpu_custom_call.1} parent=1 // pred_fallthru
      _
    // Predicated region
    $region34: #{tpu_custom_call.1} parent=1 // pred_check
      _
    $region35: #{tpu_custom_call.1} parent=1 // pred_check_branch
      %43 = sbr.rel (0) target = $region37
    $region36: #{tpu_custom_call.1} parent=1 // pred_region
      %45 = dma.done [#allocation5], 256
    $region37: #{tpu_custom_call.1} parent=1 // pred_fallthru
      _
    %v47 = vld [vmem:[%s0] sm:$0xff]
    %v48 = vld [vmem:[%s0 + $0x8] sm:$0xff]
    %v49 = vld [vmem:[%s0 + $0x10] sm:$0xff]
    %v50 = vld [vmem:[%s0 + $0x18] sm:$0xff]
    %v51 = vld [vmem:[%s0 + $0x20] sm:$0xff]
    %v52 = vld [vmem:[%s0 + $0x28] sm:$0xff]
    %v53 = vld [vmem:[%s0 + $0x30] sm:$0xff]
    %v54 = vld [vmem:[%s0 + $0x38] sm:$0xff]
    %v55 = vld [vmem:[%s1] sm:$0xff]
    %v56 = vld [vmem:[%s1 + $0x8] sm:$0xff]
    %v57 = vld [vmem:[%s3] sm:$0x1]
    %v59 = vperm.slane %v57, 0
    %vm61 = vcmask 130048
    %v63 = vsel %vm61, %v47, 0
    %v66 = vsel %vm61, %v48, 0
    %v69 = vsel %vm61, %v49, 0
    %v72 = vsel %vm61, %v50, 0
    %v75 = vsel %vm61, %v51, 0
    %v78 = vsel %vm61, %v52, 0
    %v81 = vsel %vm61, %v53, 0
    %v84 = vsel %vm61, %v54, 0
    %86 = vmatpush.msra.mxu0 0.0
    %87 = vmatpush.msra.mxu0 0.0
    %88 = vmatpush.msra.mxu0 0.0
    %89 = vmatpush.msra.mxu0 0.0
    %90 = vmatpush.msra.mxu0 0.0
    %91 = vmatpush.msra.mxu0 0.0
    %92 = vmatpush.msra.mxu0 0.0
    %93 = vmatpush.msra.mxu0 0.0
    %94 = vmatpush.msra.mxu0 0.0
    %95 = vmatpush.msra.mxu0 0.0
    %96 = vmatpush.msra.mxu0 0.0
    %97 = vmatpush.msra.mxu0 0.0
    %98 = vmatpush.msra.mxu0 0.0
    %99 = vmatpush.msra.mxu0 0.0
    %100 = vmatpush.msra.mxu0 %v56
    %101 = vmatpush.msra.mxu0 %v55
    %102 = vmatmul.f32.gmra.mxu0 %v63
    %v103 = vpop.f32.mrf.mxu0
    %v104 = vadd.f32 %v59, %v103
    %105 = vmatmul.f32.gmra.mxu0 %v66
    %v106 = vpop.f32.mrf.mxu0
    %v107 = vadd.f32 %v59, %v106
    %108 = vmatmul.f32.gmra.mxu0 %v69
    %v109 = vpop.f32.mrf.mxu0
    %v110 = vadd.f32 %v59, %v109
    %111 = vmatmul.f32.gmra.mxu0 %v72
    %v112 = vpop.f32.mrf.mxu0
    %v113 = vadd.f32 %v59, %v112
    %114 = vmatmul.f32.gmra.mxu0 %v75
    %v115 = vpop.f32.mrf.mxu0
    %v116 = vadd.f32 %v59, %v115
    %117 = vmatmul.f32.gmra.mxu0 %v78
    %v118 = vpop.f32.mrf.mxu0
    %v119 = vadd.f32 %v59, %v118
    %120 = vmatmul.f32.gmra.mxu0 %v81
    %v121 = vpop.f32.mrf.mxu0
    %v122 = vadd.f32 %v59, %v121
    %123 = vmatmul.f32.gmra.mxu0 %v84
    %v124 = vpop.f32.mrf.mxu0
    %v125 = vadd.f32 %v59, %v124
    %126 = vdwg.mxu0
    %127 = vst [vmem:[#allocation2] sm:$0xff] %v104
    %128 = vst [vmem:[#allocation2 + $0x8] sm:$0xff] %v107
    %129 = vst [vmem:[#allocation2 + $0x10] sm:$0xff] %v110
    %130 = vst [vmem:[#allocation2 + $0x18] sm:$0xff] %v113
    %131 = vst [vmem:[#allocation2 + $0x20] sm:$0xff] %v116
    %132 = vst [vmem:[#allocation2 + $0x28] sm:$0xff] %v119
    %133 = vst [vmem:[#allocation2 + $0x30] sm:$0xff] %v122
    %134 = vst [vmem:[#allocation2 + $0x38] sm:$0xff] %v125
    %v135 = vld [vmem:[#allocation4] sm:$0xf]
    %v136 = vld [vmem:[#allocation4 + $0x4] sm:$0xf]
    %v137 = vld [vmem:[#allocation4 + $0x8] sm:$0xf]
    %v138 = vld [vmem:[#allocation4 + $0xc] sm:$0xf]
    %v139 = vld [vmem:[#allocation2] sm:$0xff]
    %v144 = vunpack.c.l.b16 %v135
    %v145 = vunpack.c.l.b16 %v136
    %v146 = vunpack.c.l.b16 %v137
    %v147 = vunpack.c.l.b16 %v138
    %v148 = vpack.c.b16 %v145, %v144
    %v149 = vpack.c.b16 %v147, %v146
    %vm152 = vcmask 261120
    %v154 = vsel %vm152, 0, 0
    %156 = vmatpush.bf16.msra.mxu0 0
    %157 = vmatpush.bf16.msra.mxu0 0
    %158 = vmatpush.bf16.msra.mxu0 0
    %159 = vmatpush.bf16.msra.mxu0 0
    %160 = vmatpush.bf16.msra.mxu0 0
    %161 = vmatpush.bf16.msra.mxu0 0
    %162 = vmatpush.bf16.msra.mxu0 %v149
    %163 = vmatpush.bf16.msra.mxu0 %v148
    %164 = vmatmul.bf16.gmra.mxu0 %v154
    %v165 = vpop.f32.mrf.mxu0
    %v166 = vadd.f32 0.0, %v165
    %v167 = vpop.f32.mrf.mxu0
    %168 = vdwg.mxu0
    %v169 = vadd.f32 %v139, %v166
    %v170 = vxor.u32 %v169, 2147483648
    %v171 = vmul.f32 %v170, 1.442695
    %v172 = vpow.pop %v171
    %v173 = vadd.f32 %v172, 1.0
    %v174 = vrcp.pop %v173
    %v175 = vmul.f32 %v173, %v174
    %v176 = vsub.f32 1.0, %v175
    %v177 = vmul.f32 %v174, %v176
    %v178 = vadd.f32 %v174, %v177
    %vm179 = vweird.f32 %v173
    %vm180 = vweird.f32 %v174
    %vm181 = vmor %vm179, %vm180
    %v182 = vsel %vm181, %v174, %v178
    %v183 = vand.u32 2147483647, %v173
    %vm184 = vcmp.eq.f32.partialorder %v183, 8.507059e+37
    %v185 = vand.u32 %v173, 2147483648
    %v186 = vor.u32 1.1754944e-38, %v185
    %v187 = vsel %vm184, %v186, %v182
    %v188 = vmul.f32 1.0, %v187
    %v189 = vmul.f32 %v188, 2.0
    %v190 = vsub.f32 %v189, 1.0
    %v191 = vmul.f32 %v188, 0.0
    %193 = vrot.lane.b32.xlu0 %v190, 64
    %v194 = vpop.permute.xlu0 %193
    %v196 = vmul.f32 %v188, %v194
    %198 = vrot.lane.b32.xlu0 %v196, 32
    %v199 = vpop.permute.xlu0 %198
    %v201 = vadd.f32 %v191, %v199
    %v202 = vtanh.pop %v201
    %204 = vrot.lane.b32.xlu0 %v202, 64
    %v205 = vpop.permute.xlu0 %204
    %v207 = vmul.f32 %v188, %v205
    %209 = vrot.lane.b32.xlu0 %v207, 32
    %v210 = vpop.permute.xlu0 %209
    %212 = vst.msk [vmem:[#allocation3] sm:$0xff] %vm152, %v210
    %s213 = scalar_lea.vmem [#allocation2], 8
    %v214 = vld [vmem:[%s213] sm:$0xff]
    %v215 = vpack.c.bf16 %v207, %v207
    %217 = vrot.lane.b32.xlu0 %v215, 32
    %v218 = vpop.permute.xlu0 %217
    %v220 = vsel %vm152, %v218, 0
    %222 = vmatpush.bf16.msra.mxu0 0
    %223 = vmatpush.bf16.msra.mxu0 0
    %224 = vmatpush.bf16.msra.mxu0 0
    %225 = vmatpush.bf16.msra.mxu0 0
    %226 = vmatpush.bf16.msra.mxu0 0
    %227 = vmatpush.bf16.msra.mxu0 0
    %228 = vmatpush.bf16.msra.mxu0 %v149
    %229 = vmatpush.bf16.msra.mxu0 %v148
    %230 = vmatmul.bf16.gmra.mxu0 %v220
    %v231 = vpop.f32.mrf.mxu0
    %v232 = vadd.f32 0.0, %v231
    %v233 = vpop.f32.mrf.mxu0
    %234 = vdwg.mxu0
    %v235 = vadd.f32 %v214, %v232
    %v236 = vxor.u32 %v235, 2147483648
    %v237 = vmul.f32 %v236, 1.442695
    %v238 = vpow.pop %v237
    %v239 = vadd.f32 %v238, 1.0
    %v240 = vrcp.pop %v239
    %v241 = vmul.f32 %v239, %v240
    %v242 = vsub.f32 1.0, %v241
    %v243 = vmul.f32 %v240, %v242
    %v244 = vadd.f32 %v240, %v243
    %vm245 = vweird.f32 %v239
    %vm246 = vweird.f32 %v240
    %vm247 = vmor %vm245, %vm246
    %v248 = vsel %vm247, %v240, %v244
    %v249 = vand.u32 2147483647, %v239
    %vm250 = vcmp.eq.f32.partialorder %v249, 8.507059e+37
    %v251 = vand.u32 %v239, 2147483648
    %v252 = vor.u32 1.1754944e-38, %v251
    %v253 = vsel %vm250, %v252, %v248
    %v254 = vmul.f32 1.0, %v253
    %v255 = vmul.f32 %v254, 2.0
    %v256 = vsub.f32 %v255, 1.0
    %v257 = vmul.f32 %v254, %v201
    %259 = vrot.lane.b32.xlu0 %v256, 64
    %v260 = vpop.permute.xlu0 %259
    %v262 = vmul.f32 %v254, %v260
    %264 = vrot.lane.b32.xlu0 %v262, 32
    %v265 = vpop.permute.xlu0 %264
    %v267 = vadd.f32 %v257, %v265
    %v268 = vtanh.pop %v267
    %270 = vrot.lane.b32.xlu0 %v268, 64
    %v271 = vpop.permute.xlu0 %270
    %v273 = vmul.f32 %v254, %v271
    %275 = vrot.lane.b32.xlu0 %v273, 32
    %v276 = vpop.permute.xlu0 %275
    %s278 = scalar_lea.vmem [#allocation3], 8
    %279 = vst.msk [vmem:[%s278] sm:$0xff] %vm152, %v276
    %s280 = scalar_lea.vmem [#allocation2], 16
    %v281 = vld [vmem:[%s280] sm:$0xff]
    %v282 = vpack.c.bf16 %v273, %v273
    %284 = vrot.lane.b32.xlu0 %v282, 32
    %v285 = vpop.permute.xlu0 %284
    %v287 = vsel %vm152, %v285, 0
    %289 = vmatpush.bf16.msra.mxu0 0
    %290 = vmatpush.bf16.msra.mxu0 0
    %291 = vmatpush.bf16.msra.mxu0 0
    %292 = vmatpush.bf16.msra.mxu0 0
    %293 = vmatpush.bf16.msra.mxu0 0
    %294 = vmatpush.bf16.msra.mxu0 0
    %295 = vmatpush.bf16.msra.mxu0 %v149
    %296 = vmatpush.bf16.msra.mxu0 %v148
    %297 = vmatmul.bf16.gmra.mxu0 %v287
    %v298 = vpop.f32.mrf.mxu0
    %v299 = vadd.f32 0.0, %v298
    %v300 = vpop.f32.mrf.mxu0
    %301 = vdwg.mxu0
    %v302 = vadd.f32 %v281, %v299
    %v303 = vxor.u32 %v302, 2147483648
    %v304 = vmul.f32 %v303, 1.442695
    %v305 = vpow.pop %v304
    %v306 = vadd.f32 %v305, 1.0
    %v307 = vrcp.pop %v306
    %v308 = vmul.f32 %v306, %v307
    %v309 = vsub.f32 1.0, %v308
    %v310 = vmul.f32 %v307, %v309
    %v311 = vadd.f32 %v307, %v310
    %vm312 = vweird.f32 %v306
    %vm313 = vweird.f32 %v307
    %vm314 = vmor %vm312, %vm313
    %v315 = vsel %vm314, %v307, %v311
    %v316 = vand.u32 2147483647, %v306
    %vm317 = vcmp.eq.f32.partialorder %v316, 8.507059e+37
    %v318 = vand.u32 %v306, 2147483648
    %v319 = vor.u32 1.1754944e-38, %v318
    %v320 = vsel %vm317, %v319, %v315
    %v321 = vmul.f32 1.0, %v320
    %v322 = vmul.f32 %v321, 2.0
    %v323 = vsub.f32 %v322, 1.0
    %v324 = vmul.f32 %v321, %v267
    %326 = vrot.lane.b32.xlu0 %v323, 64
    %v327 = vpop.permute.xlu0 %326
    %v329 = vmul.f32 %v321, %v327
    %331 = vrot.lane.b32.xlu0 %v329, 32
    %v332 = vpop.permute.xlu0 %331
    %v334 = vadd.f32 %v324, %v332
    %v335 = vtanh.pop %v334
    %337 = vrot.lane.b32.xlu0 %v335, 64
    %v338 = vpop.permute.xlu0 %337
    %v340 = vmul.f32 %v321, %v338
    %342 = vrot.lane.b32.xlu0 %v340, 32
    %v343 = vpop.permute.xlu0 %342
    %s345 = scalar_lea.vmem [#allocation3], 16
    %346 = vst.msk [vmem:[%s345] sm:$0xff] %vm152, %v343
    %s347 = scalar_lea.vmem [#allocation2], 24
    %v348 = vld [vmem:[%s347] sm:$0xff]
    %v349 = vpack.c.bf16 %v340, %v340
    %351 = vrot.lane.b32.xlu0 %v349, 32
    %v352 = vpop.permute.xlu0 %351
    %v354 = vsel %vm152, %v352, 0
    %356 = vmatpush.bf16.msra.mxu0 0
    %357 = vmatpush.bf16.msra.mxu0 0
    %358 = vmatpush.bf16.msra.mxu0 0
    %359 = vmatpush.bf16.msra.mxu0 0
    %360 = vmatpush.bf16.msra.mxu0 0
    %361 = vmatpush.bf16.msra.mxu0 0
    %362 = vmatpush.bf16.msra.mxu0 %v149
    %363 = vmatpush.bf16.msra.mxu0 %v148
    %364 = vmatmul.bf16.gmra.mxu0 %v354
    %v365 = vpop.f32.mrf.mxu0
    %v366 = vadd.f32 0.0, %v365
    %v367 = vpop.f32.mrf.mxu0
    %368 = vdwg.mxu0
    %v369 = vadd.f32 %v348, %v366
    %v370 = vxor.u32 %v369, 2147483648
    %v371 = vmul.f32 %v370, 1.442695
    %v372 = vpow.pop %v371
    %v373 = vadd.f32 %v372, 1.0
    %v374 = vrcp.pop %v373
    %v375 = vmul.f32 %v373, %v374
    %v376 = vsub.f32 1.0, %v375
    %v377 = vmul.f32 %v374, %v376
    %v378 = vadd.f32 %v374, %v377
    %vm379 = vweird.f32 %v373
    %vm380 = vweird.f32 %v374
    %vm381 = vmor %vm379, %vm380
    %v382 = vsel %vm381, %v374, %v378
    %v383 = vand.u32 2147483647, %v373
    %vm384 = vcmp.eq.f32.partialorder %v383, 8.507059e+37
    %v385 = vand.u32 %v373, 2147483648
    %v386 = vor.u32 1.1754944e-38, %v385
    %v387 = vsel %vm384, %v386, %v382
    %v388 = vmul.f32 1.0, %v387
    %v389 = vmul.f32 %v388, 2.0
    %v390 = vsub.f32 %v389, 1.0
    %v391 = vmul.f32 %v388, %v334
    %393 = vrot.lane.b32.xlu0 %v390, 64
    %v394 = vpop.permute.xlu0 %393
    %v396 = vmul.f32 %v388, %v394
    %398 = vrot.lane.b32.xlu0 %v396, 32
    %v399 = vpop.permute.xlu0 %398
    %v401 = vadd.f32 %v391, %v399
    %v402 = vtanh.pop %v401
    %404 = vrot.lane.b32.xlu0 %v402, 64
    %v405 = vpop.permute.xlu0 %404
    %v407 = vmul.f32 %v388, %v405
    %409 = vrot.lane.b32.xlu0 %v407, 32
    %v410 = vpop.permute.xlu0 %409
    %s412 = scalar_lea.vmem [#allocation3], 24
    %413 = vst.msk [vmem:[%s412] sm:$0xff] %vm152, %v410
    %s414 = scalar_lea.vmem [#allocation2], 32
    %v415 = vld [vmem:[%s414] sm:$0xff]
    %v416 = vpack.c.bf16 %v407, %v407
    %418 = vrot.lane.b32.xlu0 %v416, 32
    %v419 = vpop.permute.xlu0 %418
    %v421 = vsel %vm152, %v419, 0
    %423 = vmatpush.bf16.msra.mxu0 0
    %424 = vmatpush.bf16.msra.mxu0 0
    %425 = vmatpush.bf16.msra.mxu0 0
    %426 = vmatpush.bf16.msra.mxu0 0
    %427 = vmatpush.bf16.msra.mxu0 0
    %428 = vmatpush.bf16.msra.mxu0 0
    %429 = vmatpush.bf16.msra.mxu0 %v149
    %430 = vmatpush.bf16.msra.mxu0 %v148
    %431 = vmatmul.bf16.gmra.mxu0 %v421
    %v432 = vpop.f32.mrf.mxu0
    %v433 = vadd.f32 0.0, %v432
    %v434 = vpop.f32.mrf.mxu0
    %435 = vdwg.mxu0
    %v436 = vadd.f32 %v415, %v433
    %v437 = vxor.u32 %v436, 2147483648
    %v438 = vmul.f32 %v437, 1.442695
    %v439 = vpow.pop %v438
    %v440 = vadd.f32 %v439, 1.0
    %v441 = vrcp.pop %v440
    %v442 = vmul.f32 %v440, %v441
    %v443 = vsub.f32 1.0, %v442
    %v444 = vmul.f32 %v441, %v443
    %v445 = vadd.f32 %v441, %v444
    %vm446 = vweird.f32 %v440
    %vm447 = vweird.f32 %v441
    %vm448 = vmor %vm446, %vm447
    %v449 = vsel %vm448, %v441, %v445
    %v450 = vand.u32 2147483647, %v440
    %vm451 = vcmp.eq.f32.partialorder %v450, 8.507059e+37
    %v452 = vand.u32 %v440, 2147483648
    %v453 = vor.u32 1.1754944e-38, %v452
    %v454 = vsel %vm451, %v453, %v449
    %v455 = vmul.f32 1.0, %v454
    %v456 = vmul.f32 %v455, 2.0
    %v457 = vsub.f32 %v456, 1.0
    %v458 = vmul.f32 %v455, %v401
    %460 = vrot.lane.b32.xlu0 %v457, 64
    %v461 = vpop.permute.xlu0 %460
    %v463 = vmul.f32 %v455, %v461
    %465 = vrot.lane.b32.xlu0 %v463, 32
    %v466 = vpop.permute.xlu0 %465
    %v468 = vadd.f32 %v458, %v466
    %v469 = vtanh.pop %v468
    %471 = vrot.lane.b32.xlu0 %v469, 64
    %v472 = vpop.permute.xlu0 %471
    %v474 = vmul.f32 %v455, %v472
    %476 = vrot.lane.b32.xlu0 %v474, 32
    %v477 = vpop.permute.xlu0 %476
    %s479 = scalar_lea.vmem [#allocation3], 32
    %480 = vst.msk [vmem:[%s479] sm:$0xff] %vm152, %v477
    %s481 = scalar_lea.vmem [#allocation2], 40
    %v482 = vld [vmem:[%s481] sm:$0xff]
    %v483 = vpack.c.bf16 %v474, %v474
    %485 = vrot.lane.b32.xlu0 %v483, 32
    %v486 = vpop.permute.xlu0 %485
    %v488 = vsel %vm152, %v486, 0
    %490 = vmatpush.bf16.msra.mxu0 0
    %491 = vmatpush.bf16.msra.mxu0 0
    %492 = vmatpush.bf16.msra.mxu0 0
    %493 = vmatpush.bf16.msra.mxu0 0
    %494 = vmatpush.bf16.msra.mxu0 0
    %495 = vmatpush.bf16.msra.mxu0 0
    %496 = vmatpush.bf16.msra.mxu0 %v149
    %497 = vmatpush.bf16.msra.mxu0 %v148
    %498 = vmatmul.bf16.gmra.mxu0 %v488
    %v499 = vpop.f32.mrf.mxu0
    %v500 = vadd.f32 0.0, %v499
    %v501 = vpop.f32.mrf.mxu0
    %502 = vdwg.mxu0
    %v503 = vadd.f32 %v482, %v500
    %v504 = vxor.u32 %v503, 2147483648
    %v505 = vmul.f32 %v504, 1.442695
    %v506 = vpow.pop %v505
    %v507 = vadd.f32 %v506, 1.0
    %v508 = vrcp.pop %v507
    %v509 = vmul.f32 %v507, %v508
    %v510 = vsub.f32 1.0, %v509
    %v511 = vmul.f32 %v508, %v510
    %v512 = vadd.f32 %v508, %v511
    %vm513 = vweird.f32 %v507
    %vm514 = vweird.f32 %v508
    %vm515 = vmor %vm513, %vm514
    %v516 = vsel %vm515, %v508, %v512
    %v517 = vand.u32 2147483647, %v507
    %vm518 = vcmp.eq.f32.partialorder %v517, 8.507059e+37
    %v519 = vand.u32 %v507, 2147483648
    %v520 = vor.u32 1.1754944e-38, %v519
    %v521 = vsel %vm518, %v520, %v516
    %v522 = vmul.f32 1.0, %v521
    %v523 = vmul.f32 %v522, 2.0
    %v524 = vsub.f32 %v523, 1.0
    %v525 = vmul.f32 %v522, %v468
    %527 = vrot.lane.b32.xlu0 %v524, 64
    %v528 = vpop.permute.xlu0 %527
    %v530 = vmul.f32 %v522, %v528
    %532 = vrot.lane.b32.xlu0 %v530, 32
    %v533 = vpop.permute.xlu0 %532
    %v535 = vadd.f32 %v525, %v533
    %v536 = vtanh.pop %v535
    %538 = vrot.lane.b32.xlu0 %v536, 64
    %v539 = vpop.permute.xlu0 %538
    %v541 = vmul.f32 %v522, %v539
    %543 = vrot.lane.b32.xlu0 %v541, 32
    %v544 = vpop.permute.xlu0 %543
    %s546 = scalar_lea.vmem [#allocation3], 40
    %547 = vst.msk [vmem:[%s546] sm:$0xff] %vm152, %v544
    %s548 = scalar_lea.vmem [#allocation2], 48
    %v549 = vld [vmem:[%s548] sm:$0xff]
    %v550 = vpack.c.bf16 %v541, %v541
    %552 = vrot.lane.b32.xlu0 %v550, 32
    %v553 = vpop.permute.xlu0 %552
    %v555 = vsel %vm152, %v553, 0
    %557 = vmatpush.bf16.msra.mxu0 0
    %558 = vmatpush.bf16.msra.mxu0 0
    %559 = vmatpush.bf16.msra.mxu0 0
    %560 = vmatpush.bf16.msra.mxu0 0
    %561 = vmatpush.bf16.msra.mxu0 0
    %562 = vmatpush.bf16.msra.mxu0 0
    %563 = vmatpush.bf16.msra.mxu0 %v149
    %564 = vmatpush.bf16.msra.mxu0 %v148
    %565 = vmatmul.bf16.gmra.mxu0 %v555
    %v566 = vpop.f32.mrf.mxu0
    %v567 = vadd.f32 0.0, %v566
    %v568 = vpop.f32.mrf.mxu0
    %569 = vdwg.mxu0
    %v570 = vadd.f32 %v549, %v567
    %v571 = vxor.u32 %v570, 2147483648
    %v572 = vmul.f32 %v571, 1.442695
    %v573 = vpow.pop %v572
    %v574 = vadd.f32 %v573, 1.0
    %v575 = vrcp.pop %v574
    %v576 = vmul.f32 %v574, %v575
    %v577 = vsub.f32 1.0, %v576
    %v578 = vmul.f32 %v575, %v577
    %v579 = vadd.f32 %v575, %v578
    %vm580 = vweird.f32 %v574
    %vm581 = vweird.f32 %v575
    %vm582 = vmor %vm580, %vm581
    %v583 = vsel %vm582, %v575, %v579
    %v584 = vand.u32 2147483647, %v574
    %vm585 = vcmp.eq.f32.partialorder %v584, 8.507059e+37
    %v586 = vand.u32 %v574, 2147483648
    %v587 = vor.u32 1.1754944e-38, %v586
    %v588 = vsel %vm585, %v587, %v583
    %v589 = vmul.f32 1.0, %v588
    %v590 = vmul.f32 %v589, 2.0
    %v591 = vsub.f32 %v590, 1.0
    %v592 = vmul.f32 %v589, %v535
    %594 = vrot.lane.b32.xlu0 %v591, 64
    %v595 = vpop.permute.xlu0 %594
    %v597 = vmul.f32 %v589, %v595
    %599 = vrot.lane.b32.xlu0 %v597, 32
    %v600 = vpop.permute.xlu0 %599
    %v602 = vadd.f32 %v592, %v600
    %v603 = vtanh.pop %v602
    %605 = vrot.lane.b32.xlu0 %v603, 64
    %v606 = vpop.permute.xlu0 %605
    %v608 = vmul.f32 %v589, %v606
    %610 = vrot.lane.b32.xlu0 %v608, 32
    %v611 = vpop.permute.xlu0 %610
    %s613 = scalar_lea.vmem [#allocation3], 48
    %614 = vst.msk [vmem:[%s613] sm:$0xff] %vm152, %v611
    %s615 = scalar_lea.vmem [#allocation2], 56
    %v616 = vld [vmem:[%s615] sm:$0xff]
    %v617 = vpack.c.bf16 %v608, %v608
    %619 = vrot.lane.b32.xlu0 %v617, 32
    %v620 = vpop.permute.xlu0 %619
    %v622 = vsel %vm152, %v620, 0
    %624 = vmatpush.bf16.msra.mxu0 0
    %625 = vmatpush.bf16.msra.mxu0 0
    %626 = vmatpush.bf16.msra.mxu0 0
    %627 = vmatpush.bf16.msra.mxu0 0
    %628 = vmatpush.bf16.msra.mxu0 0
    %629 = vmatpush.bf16.msra.mxu0 0
    %630 = vmatpush.bf16.msra.mxu0 %v149
    %631 = vmatpush.bf16.msra.mxu0 %v148
    %632 = vmatmul.bf16.gmra.mxu0 %v622
    %v633 = vpop.f32.mrf.mxu0
    %v634 = vadd.f32 0.0, %v633
    %v635 = vpop.f32.mrf.mxu0
    %636 = vdwg.mxu0
    %v637 = vadd.f32 %v616, %v634
    %v638 = vxor.u32 %v637, 2147483648
    %v639 = vmul.f32 %v638, 1.442695
    %v640 = vpow.pop %v639
    %v641 = vadd.f32 %v640, 1.0
    %v642 = vrcp.pop %v641
    %v643 = vmul.f32 %v641, %v642
    %v644 = vsub.f32 1.0, %v643
    %v645 = vmul.f32 %v642, %v644
    %v646 = vadd.f32 %v642, %v645
    %vm647 = vweird.f32 %v641
    %vm648 = vweird.f32 %v642
    %vm649 = vmor %vm647, %vm648
    %v650 = vsel %vm649, %v642, %v646
    %v651 = vand.u32 2147483647, %v641
    %vm652 = vcmp.eq.f32.partialorder %v651, 8.507059e+37
    %v653 = vand.u32 %v641, 2147483648
    %v654 = vor.u32 1.1754944e-38, %v653
    %v655 = vsel %vm652, %v654, %v650
    %v656 = vmul.f32 1.0, %v655
    %v657 = vmul.f32 %v656, 2.0
    %v658 = vsub.f32 %v657, 1.0
    %v659 = vmul.f32 %v656, %v602
    %661 = vrot.lane.b32.xlu0 %v658, 64
    %v662 = vpop.permute.xlu0 %661
    %v664 = vmul.f32 %v656, %v662
    %666 = vrot.lane.b32.xlu0 %v664, 32
    %v667 = vpop.permute.xlu0 %666
    %v669 = vadd.f32 %v659, %v667
    %v670 = vtanh.pop %v669
    %672 = vrot.lane.b32.xlu0 %v670, 64
    %v673 = vpop.permute.xlu0 %672
    %v675 = vmul.f32 %v656, %v673
    %677 = vrot.lane.b32.xlu0 %v675, 32
    %v678 = vpop.permute.xlu0 %677
    %s680 = scalar_lea.vmem [#allocation3], 56
    %681 = vst.msk [vmem:[%s680] sm:$0xff] %vm152, %v678
    %v682 = vld [vmem:[#allocation3] sm:$0xff]
    %v683 = vld [vmem:[#allocation3 + $0x8] sm:$0xff]
    %v684 = vld [vmem:[#allocation3 + $0x10] sm:$0xff]
    %v685 = vld [vmem:[#allocation3 + $0x18] sm:$0xff]
    %v686 = vld [vmem:[#allocation3 + $0x20] sm:$0xff]
    %v687 = vld [vmem:[#allocation3 + $0x28] sm:$0xff]
    %v688 = vld [vmem:[#allocation3 + $0x30] sm:$0xff]
    %v689 = vld [vmem:[#allocation3 + $0x38] sm:$0xff]
    %v690 = vld [vmem:[%s4] sm:$0xff]
    %v691 = vld [vmem:[%s4 + $0x8] sm:$0xff]
    %v692 = vld [vmem:[%s4 + $0x10] sm:$0xff]
    %v693 = vld [vmem:[%s4 + $0x18] sm:$0xff]
    %v694 = vld [vmem:[%s5] sm:$0x1]
    %v696 = vperm.slane %v694, 0
    %v699 = vsel %vm152, %v682, 0
    %v702 = vsel %vm152, %v683, 0
    %v705 = vsel %vm152, %v684, 0
    %v708 = vsel %vm152, %v685, 0
    %v711 = vsel %vm152, %v686, 0
    %v714 = vsel %vm152, %v687, 0
    %v717 = vsel %vm152, %v688, 0
    %v720 = vsel %vm152, %v689, 0
    %722 = vmatpush.msra.mxu0 0.0
    %723 = vmatpush.msra.mxu0 0.0
    %724 = vmatpush.msra.mxu0 0.0
    %725 = vmatpush.msra.mxu0 0.0
    %726 = vmatpush.msra.mxu0 0.0
    %727 = vmatpush.msra.mxu0 0.0
    %728 = vmatpush.msra.mxu0 0.0
    %729 = vmatpush.msra.mxu0 0.0
    %730 = vmatpush.msra.mxu0 0.0
    %731 = vmatpush.msra.mxu0 0.0
    %732 = vmatpush.msra.mxu0 0.0
    %733 = vmatpush.msra.mxu0 0.0
    %734 = vmatpush.msra.mxu0 %v693
    %735 = vmatpush.msra.mxu0 %v692
    %736 = vmatpush.msra.mxu0 %v691
    %737 = vmatpush.msra.mxu0 %v690
    %738 = vmatmul.f32.gmra.mxu0 %v699
    %v739 = vpop.f32.mrf.mxu0
    %v740 = vadd.f32 %v696, %v739
    %741 = vmatmul.f32.gmra.mxu0 %v702
    %v742 = vpop.f32.mrf.mxu0
    %v743 = vadd.f32 %v696, %v742
    %744 = vmatmul.f32.gmra.mxu0 %v705
    %v745 = vpop.f32.mrf.mxu0
    %v746 = vadd.f32 %v696, %v745
    %747 = vmatmul.f32.gmra.mxu0 %v708
    %v748 = vpop.f32.mrf.mxu0
    %v749 = vadd.f32 %v696, %v748
    %750 = vmatmul.f32.gmra.mxu0 %v711
    %v751 = vpop.f32.mrf.mxu0
    %v752 = vadd.f32 %v696, %v751
    %753 = vmatmul.f32.gmra.mxu0 %v714
    %v754 = vpop.f32.mrf.mxu0
    %v755 = vadd.f32 %v696, %v754
    %756 = vmatmul.f32.gmra.mxu0 %v717
    %v757 = vpop.f32.mrf.mxu0
    %v758 = vadd.f32 %v696, %v757
    %759 = vmatmul.f32.gmra.mxu0 %v720
    %v760 = vpop.f32.mrf.mxu0
    %v761 = vadd.f32 %v696, %v760
    %762 = vdwg.mxu0
    %v763 = vmax.f32 %v740, 0.0
    %v764 = vmax.f32 %v743, 0.0
    %v765 = vmax.f32 %v746, 0.0
    %v766 = vmax.f32 %v749, 0.0
    %v767 = vmax.f32 %v752, 0.0
    %v768 = vmax.f32 %v755, 0.0
    %v769 = vmax.f32 %v758, 0.0
    %v770 = vmax.f32 %v761, 0.0
    %v771 = vld [vmem:[%s6] sm:$0xff]
    %v772 = vld [vmem:[%s6 + $0x8] sm:$0xff]
    %v773 = vld [vmem:[%s6 + $0x10] sm:$0xff]
    %v774 = vld [vmem:[%s6 + $0x18] sm:$0xff]
    %v775 = vld [vmem:[%s7] sm:$0x1]
    %v777 = vperm.slane %v775, 0
    %v780 = vsel %vm152, %v763, 0
    %v783 = vsel %vm152, %v764, 0
    %v786 = vsel %vm152, %v765, 0
    %v789 = vsel %vm152, %v766, 0
    %v792 = vsel %vm152, %v767, 0
    %v795 = vsel %vm152, %v768, 0
    %v798 = vsel %vm152, %v769, 0
    %v801 = vsel %vm152, %v770, 0
    %803 = vmatpush.msra.mxu0 0.0
    %804 = vmatpush.msra.mxu0 0.0
    %805 = vmatpush.msra.mxu0 0.0
    %806 = vmatpush.msra.mxu0 0.0
    %807 = vmatpush.msra.mxu0 0.0
    %808 = vmatpush.msra.mxu0 0.0
    %809 = vmatpush.msra.mxu0 0.0
    %810 = vmatpush.msra.mxu0 0.0
    %811 = vmatpush.msra.mxu0 0.0
    %812 = vmatpush.msra.mxu0 0.0
    %813 = vmatpush.msra.mxu0 0.0
    %814 = vmatpush.msra.mxu0 0.0
    %815 = vmatpush.msra.mxu0 %v774
    %816 = vmatpush.msra.mxu0 %v773
    %817 = vmatpush.msra.mxu0 %v772
    %818 = vmatpush.msra.mxu0 %v771
    %819 = vmatmul.f32.gmra.mxu0 %v780
    %v820 = vpop.f32.mrf.mxu0
    %v821 = vadd.f32 %v777, %v820
    %822 = vmatmul.f32.gmra.mxu0 %v783
    %v823 = vpop.f32.mrf.mxu0
    %v824 = vadd.f32 %v777, %v823
    %825 = vmatmul.f32.gmra.mxu0 %v786
    %v826 = vpop.f32.mrf.mxu0
    %v827 = vadd.f32 %v777, %v826
    %828 = vmatmul.f32.gmra.mxu0 %v789
    %v829 = vpop.f32.mrf.mxu0
    %v830 = vadd.f32 %v777, %v829
    %831 = vmatmul.f32.gmra.mxu0 %v792
    %v832 = vpop.f32.mrf.mxu0
    %v833 = vadd.f32 %v777, %v832
    %834 = vmatmul.f32.gmra.mxu0 %v795
    %v835 = vpop.f32.mrf.mxu0
    %v836 = vadd.f32 %v777, %v835
    %837 = vmatmul.f32.gmra.mxu0 %v798
    %v838 = vpop.f32.mrf.mxu0
    %v839 = vadd.f32 %v777, %v838
    %840 = vmatmul.f32.gmra.mxu0 %v801
    %v841 = vpop.f32.mrf.mxu0
    %v842 = vadd.f32 %v777, %v841
    %843 = vdwg.mxu0
    %v844 = vmax.f32 %v821, 0.0
    %v845 = vmax.f32 %v824, 0.0
    %v846 = vmax.f32 %v827, 0.0
    %v847 = vmax.f32 %v830, 0.0
    %v848 = vmax.f32 %v833, 0.0
    %v849 = vmax.f32 %v836, 0.0
    %v850 = vmax.f32 %v839, 0.0
    %v851 = vmax.f32 %v842, 0.0
    %852 = vst [vmem:[#allocation7] sm:$0xff] %v844
    %853 = vst [vmem:[#allocation7 + $0x8] sm:$0xff] %v845
    %854 = vst [vmem:[#allocation7 + $0x10] sm:$0xff] %v846
    %855 = vst [vmem:[#allocation7 + $0x18] sm:$0xff] %v847
    %856 = vst [vmem:[#allocation7 + $0x20] sm:$0xff] %v848
    %857 = vst [vmem:[#allocation7 + $0x28] sm:$0xff] %v849
    %858 = vst [vmem:[#allocation7 + $0x30] sm:$0xff] %v850
    %859 = vst [vmem:[#allocation7 + $0x38] sm:$0xff] %v851
    // Predicated region
    $region38: #{tpu_custom_call.1} parent=1 // pred_check
      _
    $region39: #{tpu_custom_call.1} parent=1 // pred_check_branch
      %861 = sbr.rel (0) target = $region41
    $region40: #{tpu_custom_call.1} parent=1 // pred_region
      %863 = vsyncadd [#allocation6], 0
      %s864 = sshll.u32 [#allocation7], 4
      %s865 = int_to_ptr.vmem [resolvable:$true] %s864
      %s866 = sshll.u32 %s8, 4
      %s867 = int_to_ptr.hbm [resolvable:$true] %s866
      %872 = dma.vmem_to_hbm [thread:$0]  %s865, 1024, %s867, [#allocation6], 128, 128, 8
    $region41: #{tpu_custom_call.1} parent=1 // pred_fallthru
      _
    // Predicated region
    $region42: #{tpu_custom_call.1} parent=1 // pred_check
      _
    $region43: #{tpu_custom_call.1} parent=1 // pred_check_branch
      %874 = sbr.rel (0) target = $region45
    $region44: #{tpu_custom_call.1} parent=1 // pred_region
      %876 = dma.done [#allocation6], 1024
    $region45: #{tpu_custom_call.1} parent=1 // pred_fallthru
      _
    %877 = vsyncpa [#allocation5], 1
    %878 = vsyncpa [#allocation6], 1

</llo_original>
